<compile_context>
chip_gen: v7x
topology: tpu7x:2x2x1
jax: 0.10.0
libtpu: 0.0.40
codegen_flags: <defaults>
</compile_context>

<pallas_src>
import functools

import jax
import jax.numpy as jnp
import numpy as np
from jax.experimental import pallas as pl
from jax.experimental.pallas import tpu as pltpu

_LANE = 128
_BF16_SUBLANE = 16


def _cnn_kernel(t_valid, x_ref, wc_ref, bc_ref, w1_ref, b1_ref, w2_ref, b2_ref, o_ref):
    # x_ref  : (Bb, Lp, E)  f32   sub-batch, time padded to a multiple of 16
    # wc_ref : (E, K*C)     bf16  packed conv weight: wc[e, k*C + c] = W_torch[c, e, k]
    # bc_ref : (1, C)       f32
    # w1_ref : (C, H)       bf16  linear1 weight (pre-transposed)
    # b1_ref : (1, H)       f32
    # w2_ref : (H, NCp)     bf16  classifier weight, lane-padded to NCp (=128)
    # b2_ref : (1, NCp)     f32
    # o_ref  : (Bb, NCp)    f32
    Bb, Lp, E = x_ref.shape
    KC = wc_ref.shape[1]
    C = bc_ref.shape[1]
    K = KC // C
    T = t_valid                                    # true valid-conv output length (static)

    # In-kernel bf16 cast: x arrives f32 straight from HBM (no wrapper-side copy).
    # Lp % 16 == 0 (wrapper guarantee) -> merging (Bb, Lp) is layout-free.
    x2 = x_ref[...].reshape(Bb * Lp, E).astype(jnp.bfloat16)

    # One fused MXU matmul over all K taps and the whole sub-batch.
    y = jnp.dot(x2, wc_ref[...], preferred_element_type=jnp.float32)   # (Bb*Lp, K*C)
    y = y.reshape(Bb, Lp, KC)

    # conv[b, t, c] = sum_k y[b, t+k, k*C + c]   (K small & static -> unrolled)
    acc = y[:, 0:T, 0:C]
    for k in range(1, K):
        acc = acc + y[:, k:k + T, k * C:(k + 1) * C]

    # Max over time, then per-channel conv bias (max is monotone in a constant).
    pooled = jnp.max(acc, axis=1) + bc_ref[...]                        # (Bb, C) f32

    # MLP head: Linear -> ReLU -> Dropout(0.5)[eval: identity] -> Linear.
    h = jnp.dot(pooled.astype(w1_ref.dtype), w1_ref[...],
                preferred_element_type=jnp.float32) + b1_ref[...]
    h = jnp.maximum(h, 0.0)
    # TODO(synk): Dropout(0.5) is identity in eval mode; training-mode RNG not implemented.
    out = jnp.dot(h.astype(w2_ref.dtype), w2_ref[...],
                  preferred_element_type=jnp.float32) + b2_ref[...]
    o_ref[...] = out.astype(o_ref.dtype)                               # lane-dense (Bb, 128) store


def pack_params(w_conv, b_conv, w1, b1, w2, b2):
    """One-time packing of torch-layout weights into kernel layout (hoisted out of the hot path)."""
    C, E, K = w_conv.shape
    H = w1.shape[0]
    NC = w2.shape[0]
    wc = jnp.transpose(w_conv, (1, 2, 0)).reshape(E, K * C).astype(jnp.bfloat16)   # (E, K*C)
    bc = jnp.asarray(b_conv, jnp.float32).reshape(1, C)
    w1p = jnp.transpose(w1, (1, 0)).astype(jnp.bfloat16)                           # (C, H)
    b1p = jnp.asarray(b1, jnp.float32).reshape(1, H)
    NCp = ((NC + _LANE - 1) // _LANE) * _LANE
    w2p = jnp.zeros((H, NCp), jnp.bfloat16).at[:, :NC].set(
        jnp.transpose(w2, (1, 0)).astype(jnp.bfloat16))
    b2p = jnp.zeros((1, NCp), jnp.float32).at[:, :NC].set(jnp.asarray(b2, jnp.float32))
    return (wc, bc, w1p, b1p, w2p, b2p)


@functools.partial(jax.jit, static_argnames=("num_classes", "batch_block"))
def cnn_forward_packed(x, packed, *, num_classes, batch_block=None):
    """Forward pass with pre-packed weights.  x: (B, L, E) f32.  Returns (B, num_classes) f32."""
    wc, bc, w1p, b1p, w2p, b2p = packed
    B, L, E = x.shape
    KC = wc.shape[1]
    C = bc.shape[1]
    K = KC // C
    H = w1p.shape[1]
    NCp = w2p.shape[1]
    if L < K:
        raise ValueError(f"seq_len L={L} must be >= kernel_size K={K}")
    T = L - K + 1                                  # true valid-conv output length (static)

    # Pad time so the in-kernel (Bb, Lp, E) -> (Bb*Lp, E) merge is layout-free
    # (bf16 sublane tile = 16).  Padded rows are never read past index L-1.
    Lp = ((L + _BF16_SUBLANE - 1) // _BF16_SUBLANE) * _BF16_SUBLANE
    if Lp != L:
        x = jnp.pad(x, ((0, 0), (0, Lp - L), (0, 0)))

    # Batch tiling: default = whole batch in one grid step (max M per MXU pass,
    # best on single-TC v5e/v6e).  To shard across v7x's two TensorCores, pass a
    # batch_block that divides B and is a multiple of 8 (f32 sublane tile) so the
    # (batch_block, NCp) output block stays (8, 128)-aligned.
    if batch_block is None:
        batch_block = B
    if batch_block != B and (B % batch_block != 0 or batch_block % 8 != 0):
        raise ValueError("batch_block must divide B and be a multiple of 8 (or equal B)")
    grid_b = B // batch_block
    single_step = grid_b == 1

    # Explicit per-step VMEM budget (defaults: 16 MiB v5e / 32 MiB v6e,v7x scoped limit;
    # 64 MiB physical on v7x -- larger shapes need the time-tiling TODO above).
    x_buffers = 1 if single_step else 2
    w_bytes = (wc.size * 2 + w1p.size * 2 + w2p.size * 2
               + bc.size * 4 + b1p.size * 4 + b2p.size * 4)
    est_bytes = (batch_block * Lp * E * 4 * x_buffers      # f32 x block(s)
                 + batch_block * Lp * KC * 4                # f32 y intermediate
                 + w_bytes + 2 * batch_block * NCp * 4)
    vmem_limit = int(min(max(2 * est_bytes, 32 * 1024 * 1024), 64 * 1024 * 1024))

    cost = pl.CostEstimate(
        flops=int(2 * B * Lp * E * KC + 2 * B * C * H + 2 * B * H * NCp),
        transcendentals=0,
        bytes_accessed=int(B * Lp * E * 4 + B * NCp * 4 + w_bytes))

    one = pl.Buffered(1)                            # constant blocks: never double-buffer
    x_mode = pl.Buffered(1) if single_step else pl.Buffered(2)

    out_padded = pl.pallas_call(
        functools.partial(_cnn_kernel, T),
        out_shape=jax.ShapeDtypeStruct((B, NCp), jnp.float32),
        grid_spec=pltpu.PrefetchScalarGridSpec(
            num_scalar_prefetch=0,
            grid=(grid_b,),
            in_specs=[
                pl.BlockSpec((batch_block, Lp, E), lambda b: (b, 0, 0), pipeline_mode=x_mode),
                pl.BlockSpec((E, KC), lambda b: (0, 0), pipeline_mode=one),
                pl.BlockSpec((1, C), lambda b: (0, 0), pipeline_mode=one),
                pl.BlockSpec((C, H), lambda b: (0, 0), pipeline_mode=one),
                pl.BlockSpec((1, H), lambda b: (0, 0), pipeline_mode=one),
                pl.BlockSpec((H, NCp), lambda b: (0, 0), pipeline_mode=one),
                pl.BlockSpec((1, NCp), lambda b: (0, 0), pipeline_mode=one),
            ],
            out_specs=pl.BlockSpec((batch_block, NCp), lambda b: (b, 0)),
        ),
        compiler_params=pltpu.CompilerParams(
            dimension_semantics=("parallel",),      # shards across TCs on v7x when grid_b > 1
            vmem_limit_bytes=vmem_limit,
        ),
        cost_estimate=cost,
    )(x, wc, bc, w1p, b1p, w2p, b2p)

    return out_padded[:, :num_classes]


def cnn_model_forward(x, w_conv, b_conv, w1, b1, w2, b2, batch_block=None):
    """Convenience wrapper taking torch-layout weights (re-packs on every call)."""
    packed = pack_params(w_conv, b_conv, w1, b1, w2, b2)
    return cnn_forward_packed(x, packed, num_classes=int(w2.shape[0]), batch_block=batch_block)


def _reference_forward(x, w_conv, b_conv, w1, b1, w2, b2):
    """Pure-JAX f32 reference with exact PyTorch semantics (eval mode)."""
    B, L, E = x.shape
    C, _, K = w_conv.shape
    T = L - K + 1
    conv = jnp.zeros((B, T, C), jnp.float32)
    for k in range(K):
        conv = conv + jnp.einsum("ble,ce->blc", x[:, k:k + T, :], w_conv[:, :, k])
    conv = conv + b_conv[None, None, :]
    pooled = jnp.max(conv, axis=1)
    h = jnp.maximum(pooled @ w1.T + b1, 0.0)
    return h @ w2.T + b2


def init_params(key, embed_dim, out_channels, kernel_size, mlp_hidden, num_classes):
    """Deterministic init mimicking PyTorch's uniform(-1/sqrt(fan_in), +), torch layouts."""
    ks = jax.random.split(key, 6)

    def uni(k, shape, fan_in):
        bound = 1.0 / jnp.sqrt(fan_in)
        return jax.random.uniform(k, shape, jnp.float32, -bound, bound)

    fan_conv = embed_dim * kernel_size
    w_conv = uni(ks[0], (out_channels, embed_dim, kernel_size), fan_conv)   # (C, E, K)
    b_conv = uni(ks[1], (out_channels,), fan_conv)                          # (C,)
    w1 = uni(ks[2], (mlp_hidden, out_channels), out_channels)               # (H, C)
    b1 = uni(ks[3], (mlp_hidden,), out_channels)                            # (H,)
    w2 = uni(ks[4], (num_classes, mlp_hidden), mlp_hidden)                  # (NC, H)
    b2 = uni(ks[5], (num_classes,), mlp_hidden)                             # (NC,)
    return w_conv, b_conv, w1, b1, w2, b2


if __name__ == "__main__":
    # Config implied by the module: word_embedding_dimension=32, out_channels=16,
    # kernel_size=3, MLP_hidden=32, num_classes=4.
    B, L, E = 2, 16, 32
    C, K, H, NC = 16, 3, 32, 4

    key = jax.random.PRNGKey(0)
    k_x, k_p, k_x2 = jax.random.split(key, 3)
    x = jax.random.normal(k_x, (B, L, E), jnp.float32)
    params = init_params(k_p, E, C, K, H, NC)

    # Pack the weights once (hoisted out of the hot path), then run the kernel.
    packed = pack_params(*params)
    out = cnn_forward_packed(x, packed, num_classes=NC, batch_block=None)
    jax.block_until_ready(out)
    assert out.shape == (B, NC), out.shape

    ref = _reference_forward(x, *params)
    # bf16 matmul inputs/weights -> ~1e-2 relative error vs the f32 reference.
    assert np.allclose(np.asarray(out), np.asarray(ref), rtol=5e-2, atol=5e-2), (
        "mismatch vs reference")

    # Non-multiple-of-16 seq_len exercises the wrapper-side time-padding path.
    x2 = jax.random.normal(k_x2, (B, 15, E), jnp.float32)
    out2 = cnn_forward_packed(x2, packed, num_classes=NC, batch_block=None)
    jax.block_until_ready(out2)
    ref2 = _reference_forward(x2, *params)
    assert np.allclose(np.asarray(out2), np.asarray(ref2), rtol=5e-2, atol=5e-2), (
        "mismatch vs reference (padded seq_len)")

    print("KERNEL_OK")
</pallas_src>

<mosaic_0001>
module attributes {stable_mosaic.version = 11 : i64} {
  func.func @_cnn_kernel(%arg0: i32, %arg1: memref<2x16x32xf32, #tpu.memory_space<vmem>>, %arg2: memref<32x48xbf16, #tpu.memory_space<vmem>>, %arg3: memref<1x16xf32, #tpu.memory_space<vmem>>, %arg4: memref<16x32xbf16, #tpu.memory_space<vmem>>, %arg5: memref<1x32xf32, #tpu.memory_space<vmem>>, %arg6: memref<32x128xbf16, #tpu.memory_space<vmem>>, %arg7: memref<1x128xf32, #tpu.memory_space<vmem>>, %arg8: memref<2x128xf32, #tpu.memory_space<vmem>>) attributes {dimension_semantics = [#tpu.dimension_semantics<parallel>], iteration_bounds = array<i64: 1>, scalar_prefetch = 0 : i64, scratch_operands = 0 : i64, tpu.core_type = #tpu.core_type<tc>, window_params = [{pipeline_mode = #tpu.pipeline_mode<synchronous>, transform_indices = @transform_0, window_bounds = array<i64: 2, 16, 32>}, {pipeline_mode = #tpu.pipeline_mode<synchronous>, transform_indices = @transform_1, window_bounds = array<i64: 32, 48>}, {pipeline_mode = #tpu.pipeline_mode<synchronous>, transform_indices = @transform_2, window_bounds = array<i64: 1, 16>}, {pipeline_mode = #tpu.pipeline_mode<synchronous>, transform_indices = @transform_3, window_bounds = array<i64: 16, 32>}, {pipeline_mode = #tpu.pipeline_mode<synchronous>, transform_indices = @transform_4, window_bounds = array<i64: 1, 32>}, {pipeline_mode = #tpu.pipeline_mode<synchronous>, transform_indices = @transform_5, window_bounds = array<i64: 32, 128>}, {pipeline_mode = #tpu.pipeline_mode<synchronous>, transform_indices = @transform_6, window_bounds = array<i64: 1, 128>}, {transform_indices = @transform_7, window_bounds = array<i64: 2, 128>}]} {
    %c0 = arith.constant 0 : index
    %c0_0 = arith.constant 0 : index
    %c0_1 = arith.constant 0 : index
    %0 = vector.load %arg1[%c0, %c0_0, %c0_1] : memref<2x16x32xf32, #tpu.memory_space<vmem>>, vector<2x16x32xf32>
    %1 = vector.shape_cast %0 : vector<2x16x32xf32> to vector<32x32xf32>
    %2 = arith.truncf %1 : vector<32x32xf32> to vector<32x32xbf16>
    %c0_2 = arith.constant 0 : index
    %c0_3 = arith.constant 0 : index
    %3 = vector.load %arg2[%c0_2, %c0_3] : memref<32x48xbf16, #tpu.memory_space<vmem>>, vector<32x48xbf16>
    %cst = arith.constant dense<0.000000e+00> : vector<32x48xf32>
    %4 = tpu.matmul %2, %3, %cst {dimension_numbers = #tpu.dot_dimension_numbers<[1], [0], [0], [1], [0, 0, 1, 1], [], []>} : vector<32x32xbf16>, vector<32x48xbf16>, vector<32x48xf32> -> vector<32x48xf32>
    %5 = vector.shape_cast %4 : vector<32x48xf32> to vector<2x16x48xf32>
    %6 = vector.extract_strided_slice %5 {offsets = [0, 0, 0], sizes = [2, 14, 16], strides = [1, 1, 1]} : vector<2x16x48xf32> to vector<2x14x16xf32>
    %7 = vector.extract_strided_slice %5 {offsets = [0, 1, 16], sizes = [2, 14, 16], strides = [1, 1, 1]} : vector<2x16x48xf32> to vector<2x14x16xf32>
    %8 = arith.addf %6, %7 : vector<2x14x16xf32>
    %9 = vector.extract_strided_slice %5 {offsets = [0, 2, 32], sizes = [2, 14, 16], strides = [1, 1, 1]} : vector<2x16x48xf32> to vector<2x14x16xf32>
    %10 = arith.addf %8, %9 : vector<2x14x16xf32>
    %cst_4 = arith.constant dense<0xFF800000> : vector<2x16xf32>
    %11 = vector.multi_reduction <maximumf>, %10, %cst_4 [1] : vector<2x14x16xf32> to vector<2x16xf32>
    %c0_5 = arith.constant 0 : index
    %c0_6 = arith.constant 0 : index
    %12 = vector.load %arg3[%c0_5, %c0_6] : memref<1x16xf32, #tpu.memory_space<vmem>>, vector<1x16xf32>
    %13 = vector.broadcast %12 : vector<1x16xf32> to vector<2x16xf32>
    %14 = arith.addf %11, %13 : vector<2x16xf32>
    %15 = arith.truncf %14 : vector<2x16xf32> to vector<2x16xbf16>
    %c0_7 = arith.constant 0 : index
    %c0_8 = arith.constant 0 : index
    %16 = vector.load %arg4[%c0_7, %c0_8] : memref<16x32xbf16, #tpu.memory_space<vmem>>, vector<16x32xbf16>
    %cst_9 = arith.constant dense<0.000000e+00> : vector<2x32xf32>
    %17 = tpu.matmul %15, %16, %cst_9 {dimension_numbers = #tpu.dot_dimension_numbers<[1], [0], [0], [1], [0, 0, 1, 1], [], []>} : vector<2x16xbf16>, vector<16x32xbf16>, vector<2x32xf32> -> vector<2x32xf32>
    %c0_10 = arith.constant 0 : index
    %c0_11 = arith.constant 0 : index
    %18 = vector.load %arg5[%c0_10, %c0_11] : memref<1x32xf32, #tpu.memory_space<vmem>>, vector<1x32xf32>
    %19 = vector.broadcast %18 : vector<1x32xf32> to vector<2x32xf32>
    %20 = arith.addf %17, %19 : vector<2x32xf32>
    %cst_12 = arith.constant 0.000000e+00 : f32
    %21 = vector.broadcast %cst_12 : f32 to vector<2x32xf32>
    %22 = arith.maximumf %20, %21 : vector<2x32xf32>
    %23 = arith.truncf %22 : vector<2x32xf32> to vector<2x32xbf16>
    %c0_13 = arith.constant 0 : index
    %c0_14 = arith.constant 0 : index
    %24 = vector.load %arg6[%c0_13, %c0_14] : memref<32x128xbf16, #tpu.memory_space<vmem>>, vector<32x128xbf16>
    %cst_15 = arith.constant dense<0.000000e+00> : vector<2x128xf32>
    %25 = tpu.matmul %23, %24, %cst_15 {dimension_numbers = #tpu.dot_dimension_numbers<[1], [0], [0], [1], [0, 0, 1, 1], [], []>} : vector<2x32xbf16>, vector<32x128xbf16>, vector<2x128xf32> -> vector<2x128xf32>
    %c0_16 = arith.constant 0 : index
    %c0_17 = arith.constant 0 : index
    %26 = vector.load %arg7[%c0_16, %c0_17] : memref<1x128xf32, #tpu.memory_space<vmem>>, vector<1x128xf32>
    %27 = vector.broadcast %26 : vector<1x128xf32> to vector<2x128xf32>
    %28 = arith.addf %25, %27 : vector<2x128xf32>
    %c0_18 = arith.constant 0 : index
    %c0_19 = arith.constant 0 : index
    %29 = vector.load %arg8[%c0_18, %c0_19] : memref<2x128xf32, #tpu.memory_space<vmem>>, vector<2x128xf32>
    tpu.vector_store %arg8[%c0_18, %c0_19], %28 {strides = array<i32>} : memref<2x128xf32, #tpu.memory_space<vmem>>, vector<2x128xf32>,
    return
  }
  func.func @transform_0(%arg0: i32) -> (i32, i32, i32) {
    %c0_i32 = arith.constant 0 : i32
    %c0_i32_0 = arith.constant 0 : i32
    %c0_i32_1 = arith.constant 0 : i32
    return %arg0, %c0_i32, %c0_i32_0 : i32, i32, i32
  }
  func.func @transform_1(%arg0: i32) -> (i32, i32) {
    %c0_i32 = arith.constant 0 : i32
    %c0_i32_0 = arith.constant 0 : i32
    %c0_i32_1 = arith.constant 0 : i32
    return %c0_i32, %c0_i32_0 : i32, i32
  }
  func.func @transform_2(%arg0: i32) -> (i32, i32) {
    %c0_i32 = arith.constant 0 : i32
    %c0_i32_0 = arith.constant 0 : i32
    %c0_i32_1 = arith.constant 0 : i32
    return %c0_i32, %c0_i32_0 : i32, i32
  }
  func.func @transform_3(%arg0: i32) -> (i32, i32) {
    %c0_i32 = arith.constant 0 : i32
    %c0_i32_0 = arith.constant 0 : i32
    %c0_i32_1 = arith.constant 0 : i32
    return %c0_i32, %c0_i32_0 : i32, i32
  }
  func.func @transform_4(%arg0: i32) -> (i32, i32) {
    %c0_i32 = arith.constant 0 : i32
    %c0_i32_0 = arith.constant 0 : i32
    %c0_i32_1 = arith.constant 0 : i32
    return %c0_i32, %c0_i32_0 : i32, i32
  }
  func.func @transform_5(%arg0: i32) -> (i32, i32) {
    %c0_i32 = arith.constant 0 : i32
    %c0_i32_0 = arith.constant 0 : i32
    %c0_i32_1 = arith.constant 0 : i32
    return %c0_i32, %c0_i32_0 : i32, i32
  }
  func.func @transform_6(%arg0: i32) -> (i32, i32) {
    %c0_i32 = arith.constant 0 : i32
    %c0_i32_0 = arith.constant 0 : i32
    %c0_i32_1 = arith.constant 0 : i32
    return %c0_i32, %c0_i32_0 : i32, i32
  }
  func.func @transform_7(%arg0: i32) -> (i32, i32) {
    %c0_i32 = arith.constant 0 : i32
    %c0_i32_0 = arith.constant 0 : i32
    return %arg0, %c0_i32 : i32, i32
  }
}

</mosaic_0001>

<llo_original>
// kernel: cnn_forward_packed.1
$region0: #{cnn_forward_packed.1}
  #allocation0 [shape = 'u32[]', space=smem, size = 0x4, offset = 0x4, fixed_abs, tag = 'smem constant byte address 0x4 - core index']
  #allocation1 [shape = 'u32[144,128]{1,0:T(1,128)}', space=vmem, size = 0x12000, scoped, tag = 'internal scratch']
  %s0 = inlined_call_operand.hbm [shape: f32[2,16,32], index: 0, kind: input, shape index: {}]
  %s1 = inlined_call_operand.hbm [shape: bf16[32,48], index: 1, kind: input, shape index: {}]
  %s2 = inlined_call_operand.vmem [shape: f32[1,16], index: 2, kind: input, shape index: {}]
  %s3 = inlined_call_operand.hbm [shape: bf16[16,32], index: 3, kind: input, shape index: {}]
  %s4 = inlined_call_operand.vmem [shape: f32[1,32], index: 4, kind: input, shape index: {}]
  %s5 = inlined_call_operand.vmem [shape: bf16[32,128], index: 5, kind: input, shape index: {}]
  %s6 = inlined_call_operand.vmem [shape: f32[1,128], index: 6, kind: input, shape index: {}]
  %s7 = inlined_call_operand.hbm [shape: f32[2,128], index: 7, kind: output, shape index: {}]
  %s8 = sld [smem:[#allocation0]]
  $region50: #{cnn_forward_packed.1} parent=0
    _
  %s10 = ssub.s32 1, %s8
  %s11 = scalar_select 0, %s10, %s8
  $region1: #{cnn_forward_packed.1} parent=0
    #allocation2 [shape = 'u8[16384]{0}', space=vmem, size = 0x4000, scoped, tag = 'input window, operand 0, single buffered']
    #allocation3 [shape = 's32[1]{0}', space=sflag, size = 0x4, scoped, tag = 'scoped memory for cnn_forward_packed.1']
    #allocation4 [shape = 's32[1]{0}', space=sflag, size = 0x4, scoped, tag = 'scoped memory for cnn_forward_packed.1']
    #allocation5 [shape = 'u8[8192]{0}', space=vmem, size = 0x2000, scoped, tag = 'input window, operand 1, single buffered']
    #allocation6 [shape = 's32[1]{0}', space=sflag, size = 0x4, scoped, tag = 'scoped memory for cnn_forward_packed.1']
    #allocation7 [shape = 'u8[4096]{0}', space=vmem, size = 0x1000, scoped, tag = 'input window, operand 3, single buffered']
    #allocation8 [shape = 'u8[1024]{0}', space=vmem, size = 0x400, scoped, tag = 'output window, operand 0, single buffered']
    %12 = vsyncpa [#allocation3], 0
    %13 = vsyncpa [#allocation6], 0
    %14 = vsyncpa [#allocation4], 0
    // Predicated region
    $region2: #{cnn_forward_packed.1} parent=1 // pred_check
      _
    $region3: #{cnn_forward_packed.1} parent=1 // pred_check_branch
      %16 = sbr.rel (0) target = $region5
    $region4: #{cnn_forward_packed.1} parent=1 // pred_region
      %s18 = ssub.s32 512, 512
      %19 = vsyncadd [#allocation3], %s18
      %s20 = sshll.u32 [#allocation2], 4
      %s21 = int_to_ptr.vmem [resolvable:$true] %s20
      %26 = dma.hbm_to_vmem [thread:$0]  %s0, 512, %s21, [#allocation3], 128, 128, 8
    $region5: #{cnn_forward_packed.1} parent=1 // pred_fallthru
      _
    // Predicated region
    $region6: #{cnn_forward_packed.1} parent=1 // pred_check
      _
    $region7: #{cnn_forward_packed.1} parent=1 // pred_check_branch
      %28 = sbr.rel (0) target = $region9
    $region8: #{cnn_forward_packed.1} parent=1 // pred_region
      %s30 = ssub.s32 256, 256
      %31 = vsyncadd [#allocation6], %s30
      %s32 = sshll.u32 [#allocation5], 4
      %s33 = int_to_ptr.vmem [resolvable:$true] %s32
      %38 = dma.hbm_to_vmem [thread:$0]  %s1, 256, %s33, [#allocation6], 64, 64, 4
    $region9: #{cnn_forward_packed.1} parent=1 // pred_fallthru
      _
    // Predicated region
    $region10: #{cnn_forward_packed.1} parent=1 // pred_check
      _
    $region11: #{cnn_forward_packed.1} parent=1 // pred_check_branch
      %40 = sbr.rel (0) target = $region13
    $region12: #{cnn_forward_packed.1} parent=1 // pred_region
      _
    $region13: #{cnn_forward_packed.1} parent=1 // pred_fallthru
      _
    // Predicated region
    $region14: #{cnn_forward_packed.1} parent=1 // pred_check
      _
    $region15: #{cnn_forward_packed.1} parent=1 // pred_check_branch
      %42 = sbr.rel (0) target = $region17
    $region16: #{cnn_forward_packed.1} parent=1 // pred_region
      %s44 = ssub.s32 128, 128
      %45 = vsyncadd [#allocation6], %s44
      %s46 = sshll.u32 [#allocation7], 4
      %s47 = int_to_ptr.vmem [resolvable:$true] %s46
      %52 = dma.hbm_to_vmem [thread:$0]  %s3, 128, %s47, [#allocation6], 64, 64, 4
    $region17: #{cnn_forward_packed.1} parent=1 // pred_fallthru
      _
    // Predicated region
    $region18: #{cnn_forward_packed.1} parent=1 // pred_check
      _
    $region19: #{cnn_forward_packed.1} parent=1 // pred_check_branch
      %54 = sbr.rel (0) target = $region21
    $region20: #{cnn_forward_packed.1} parent=1 // pred_region
      _
    $region21: #{cnn_forward_packed.1} parent=1 // pred_fallthru
      _
    // Predicated region
    $region22: #{cnn_forward_packed.1} parent=1 // pred_check
      _
    $region23: #{cnn_forward_packed.1} parent=1 // pred_check_branch
      %56 = sbr.rel (0) target = $region25
    $region24: #{cnn_forward_packed.1} parent=1 // pred_region
      _
    $region25: #{cnn_forward_packed.1} parent=1 // pred_fallthru
      _
    // Predicated region
    $region26: #{cnn_forward_packed.1} parent=1 // pred_check
      _
    $region27: #{cnn_forward_packed.1} parent=1 // pred_check_branch
      %58 = sbr.rel (0) target = $region29
    $region28: #{cnn_forward_packed.1} parent=1 // pred_region
      _
    $region29: #{cnn_forward_packed.1} parent=1 // pred_fallthru
      _
    // Predicated region
    $region30: #{cnn_forward_packed.1} parent=1 // pred_check
      _
    $region31: #{cnn_forward_packed.1} parent=1 // pred_check_branch
      %60 = sbr.rel (0) target = $region33
    $region32: #{cnn_forward_packed.1} parent=1 // pred_region
      %61 = dma.done [#allocation3], 512
    $region33: #{cnn_forward_packed.1} parent=1 // pred_fallthru
      _
    // Predicated region
    $region34: #{cnn_forward_packed.1} parent=1 // pred_check
      _
    $region35: #{cnn_forward_packed.1} parent=1 // pred_check_branch
      %63 = sbr.rel (0) target = $region37
    $region36: #{cnn_forward_packed.1} parent=1 // pred_region
      %64 = dma.done [#allocation6], 256
    $region37: #{cnn_forward_packed.1} parent=1 // pred_fallthru
      _
    // Predicated region
    $region38: #{cnn_forward_packed.1} parent=1 // pred_check
      _
    $region39: #{cnn_forward_packed.1} parent=1 // pred_check_branch
      %66 = sbr.rel (0) target = $region41
    $region40: #{cnn_forward_packed.1} parent=1 // pred_region
      %67 = dma.done [#allocation6], 128
    $region41: #{cnn_forward_packed.1} parent=1 // pred_fallthru
      _
    %v69 = vld [vmem:[#allocation2] sm:$0xff]
    %v70 = vld [vmem:[#allocation2 + $0x8] sm:$0xff]
    %v71 = vld [vmem:[#allocation2 + $0x10] sm:$0xff]
    %v72 = vld [vmem:[#allocation2 + $0x18] sm:$0xff]
    %v73 = vpack.c.bf16 %v70, %v69
    %v74 = vpack.c.bf16 %v72, %v71
    %v75 = vld [vmem:[#allocation5] sm:$0xf]
    %v76 = vld [vmem:[#allocation5 + $0x4] sm:$0xf]
    %v77 = vld [vmem:[#allocation5 + $0x8] sm:$0xf]
    %v78 = vld [vmem:[#allocation5 + $0xc] sm:$0xf]
    %v83 = vunpack.c.l.b16 %v75
    %v84 = vunpack.c.l.b16 %v76
    %v85 = vunpack.c.l.b16 %v77
    %v86 = vunpack.c.l.b16 %v78
    %v87 = vpack.c.b16 %v84, %v83
    %v88 = vpack.c.b16 %v86, %v85
    %vm91 = vcmask 261120
    %v93 = vsel %vm91, %v73, 0
    %v96 = vsel %vm91, %v74, 0
    %98 = vmatprep.subr.bf16.mxu0 0
    %99 = vmatpush1.bf16.msra.mxu0 %v87
    %100 = vmatprep.subr.bf16.mxu0 0
    %101 = vmatpush1.bf16.msra.mxu0 %v88
    %102 = vmatprep.subr.bf16.mxu0 0
    %103 = vmatpush1.bf16.msra.mxu0 0
    %104 = vmatprep.subr.bf16.mxu0 0
    %105 = vmatpush1.bf16.msra.mxu0 0
    %106 = vmatprep.subr.bf16.mxu0 0
    %107 = vmatpush1.bf16.msra.mxu0 0
    %108 = vmatprep.subr.bf16.mxu0 0
    %109 = vmatpush1.bf16.msra.mxu0 0
    %110 = vmatprep.subr.bf16.mxu0 0
    %111 = vmatpush1.bf16.msra.mxu0 0
    %112 = vmatprep.subr.bf16.mxu0 0
    %113 = vmatpush1.bf16.msra.mxu0 0
    %114 = vmatprep.subr.bf16.mxu0 0
    %115 = vmatpush1.bf16.msra.mxu0 0
    %116 = vmatprep.subr.bf16.mxu0 0
    %117 = vmatpush1.bf16.msra.mxu0 0
    %118 = vmatprep.subr.bf16.mxu0 0
    %119 = vmatpush1.bf16.msra.mxu0 0
    %120 = vmatprep.subr.bf16.mxu0 0
    %121 = vmatpush1.bf16.msra.mxu0 0
    %122 = vmatprep.subr.bf16.mxu0 0
    %123 = vmatpush1.bf16.msra.mxu0 0
    %124 = vmatprep.subr.bf16.mxu0 0
    %125 = vmatpush1.bf16.msra.mxu0 0
    %126 = vmatprep.subr.bf16.mxu0 0
    %127 = vmatpush1.bf16.msra.mxu0 0
    %128 = vmatprep.subr.bf16.mxu0 0
    %129 = vmatpush1.bf16.msra.mxu0 0
    %130 = vmatprep.mubr.bf16.mxu0 0
    %131 = vmatmul.mubr.bf16.gmra.mrb[0].mxu0 %v93
    %v132 = vpop.f32.mrb[0].mxu0
    %v133 = vadd.f32 0.0, %v132
    %v134 = vpop.f32.mrb[0].mxu0
    %v135 = vpop.f32.mrb[0].mxu0
    %v136 = vadd.f32 0.0, %v135
    %v137 = vpop.f32.mrb[0].mxu0
    %138 = vmatprep.mubr.bf16.mxu0 0
    %139 = vmatmul.mubr.bf16.gmra.mrb[0].mxu0 %v96
    %v140 = vpop.f32.mrb[0].mxu0
    %v141 = vadd.f32 0.0, %v140
    %v142 = vpop.f32.mrb[0].mxu0
    %v143 = vpop.f32.mrb[0].mxu0
    %v144 = vadd.f32 0.0, %v143
    %v145 = vpop.f32.mrb[0].mxu0
    %146 = vdwg.mxu0
    %vm151 = vcmask 1046528
    %v152 = vrot.slane %v133, 1
    %v153 = vrot.slane %v136, 1
    %v154 = vsel %vm151, %v152, %v153
    %v155 = vrot.slane %v141, 1
    %v156 = vrot.slane %v144, 1
    %v157 = vsel %vm151, %v155, %v156
    %158 = vrot.lane.b32.xlu0 %v154, 112
    %v159 = vpop.permute.xlu0 %158
    %160 = vrot.lane.b32.xlu0 %v153, 112
    %v161 = vpop.permute.xlu0 %160
    %162 = vrot.lane.b32.xlu0 %v157, 112
    %v163 = vpop.permute.xlu0 %162
    %164 = vrot.lane.b32.xlu0 %v156, 112
    %v165 = vpop.permute.xlu0 %164
    %v170 = vadd.f32 %v133, %v159
    %v171 = vadd.f32 %v136, %v161
    %v172 = vadd.f32 %v141, %v163
    %v173 = vadd.f32 %v144, %v165
    %vm174 = vcmask 1045504
    %v175 = vrot.slane %v133, 2
    %v176 = vrot.slane %v136, 2
    %v177 = vsel %vm174, %v175, %v176
    %v178 = vrot.slane %v141, 2
    %v179 = vrot.slane %v144, 2
    %v180 = vsel %vm174, %v178, %v179
    %181 = vrot.lane.b32.xlu0 %v177, 96
    %v182 = vpop.permute.xlu0 %181
    %183 = vrot.lane.b32.xlu0 %v176, 96
    %v184 = vpop.permute.xlu0 %183
    %185 = vrot.lane.b32.xlu0 %v180, 96
    %v186 = vpop.permute.xlu0 %185
    %187 = vrot.lane.b32.xlu0 %v179, 96
    %v188 = vpop.permute.xlu0 %187
    %v193 = vadd.f32 %v170, %v182
    %v194 = vadd.f32 %v171, %v184
    %v195 = vadd.f32 %v172, %v186
    %v196 = vadd.f32 %v173, %v188
    %vm197 = vcmask 130048
    %v198 = vsel %vm197, %v193, -inf
    %vm199 = vcmask 128000
    %v200 = vsel %vm199, %v194, -inf
    %v201 = vmax.f32 %v198, %v200
    %v202 = vrot.slane %v201, 4
    %v203 = vmax.f32 %v201, %v202
    %v204 = vrot.slane %v203, 2
    %v205 = vmax.f32 %v203, %v204
    %v206 = vrot.slane %v205, 1
    %v207 = vmax.f32 %v205, %v206
    %v208 = vsel %vm197, %v195, -inf
    %v209 = vsel %vm199, %v196, -inf
    %v210 = vmax.f32 %v208, %v209
    %v211 = vrot.slane %v210, 4
    %v212 = vmax.f32 %v210, %v211
    %v213 = vrot.slane %v212, 2
    %v214 = vmax.f32 %v212, %v213
    %v215 = vrot.slane %v214, 1
    %v216 = vmax.f32 %v214, %v215
    %v217 = vld [vmem:[%s2] sm:$0x1]
    %v219 = vlaneseq
    %v220 = vshrl.u32 %v219, 7
    %v221 = vsub.s32 0, %v220
    %v222 = vrot.slane %v217, %v221
    %v224 = vadd.f32 %v207, %v222
    %v225 = vadd.f32 %v216, %v222
    %v226 = vpack.c.bf16 %v224, %v224
    %v227 = vpack.c.bf16 %v225, %v225
    %v228 = vld [vmem:[#allocation7] sm:$0xf]
    %v229 = vld [vmem:[#allocation7 + $0x4] sm:$0xf]
    %v230 = vld [vmem:[%s4] sm:$0x1]
    %v232 = vlaneseq
    %v233 = vshrl.u32 %v232, 7
    %v234 = vsub.s32 0, %v233
    %v235 = vrot.slane %v230, %v234
    %v239 = vunpack.c.l.b16 %v226
    %v240 = vunpack.c.l.b16 %v227
    %v241 = vrot.slane %v240, 7
    %vm242 = vcmask 1041409
    %v243 = vsel %vm242, %v241, %v239
    %v244 = vpack.c.b16 %v243, %v243
    %v247 = vunpack.c.l.b16 %v228
    %v248 = vunpack.c.l.b16 %v229
    %v249 = vpack.c.b16 %v248, %v247
    %v252 = vsel %vm197, %v244, 0
    %254 = vmatprep.subr.bf16.mxu0 0
    %255 = vmatpush1.bf16.msra.mxu0 %v249
    %256 = vmatprep.subr.bf16.mxu0 0
    %257 = vmatpush1.bf16.msra.mxu0 0
    %258 = vmatprep.subr.bf16.mxu0 0
    %259 = vmatpush1.bf16.msra.mxu0 0
    %260 = vmatprep.subr.bf16.mxu0 0
    %261 = vmatpush1.bf16.msra.mxu0 0
    %262 = vmatprep.subr.bf16.mxu0 0
    %263 = vmatpush1.bf16.msra.mxu0 0
    %264 = vmatprep.subr.bf16.mxu0 0
    %265 = vmatpush1.bf16.msra.mxu0 0
    %266 = vmatprep.subr.bf16.mxu0 0
    %267 = vmatpush1.bf16.msra.mxu0 0
    %268 = vmatprep.subr.bf16.mxu0 0
    %269 = vmatpush1.bf16.msra.mxu0 0
    %270 = vmatprep.subr.bf16.mxu0 0
    %271 = vmatpush1.bf16.msra.mxu0 0
    %272 = vmatprep.subr.bf16.mxu0 0
    %273 = vmatpush1.bf16.msra.mxu0 0
    %274 = vmatprep.subr.bf16.mxu0 0
    %275 = vmatpush1.bf16.msra.mxu0 0
    %276 = vmatprep.subr.bf16.mxu0 0
    %277 = vmatpush1.bf16.msra.mxu0 0
    %278 = vmatprep.subr.bf16.mxu0 0
    %279 = vmatpush1.bf16.msra.mxu0 0
    %280 = vmatprep.subr.bf16.mxu0 0
    %281 = vmatpush1.bf16.msra.mxu0 0
    %282 = vmatprep.subr.bf16.mxu0 0
    %283 = vmatpush1.bf16.msra.mxu0 0
    %284 = vmatprep.subr.bf16.mxu0 0
    %285 = vmatpush1.bf16.msra.mxu0 0
    %286 = vmatprep.mubr.bf16.mxu0 0
    %287 = vmatmul.mubr.bf16.gmra.mrb[0].mxu0 %v252
    %v288 = vpop.f32.mrb[0].mxu0
    %v289 = vadd.f32 %v235, %v288
    %v290 = vpop.f32.mrb[0].mxu0
    %v291 = vpop.f32.mrb[0].mxu0
    %v292 = vpop.f32.mrb[0].mxu0
    %293 = vdwg.mxu0
    %v294 = vmax.f32 %v289, 0.0
    %v295 = vpack.c.bf16 %v294, %v294
    %v296 = vld [vmem:[%s5] sm:$0xf]
    %v297 = vld [vmem:[%s5 + $0x4] sm:$0xf]
    %v298 = vld [vmem:[%s5 + $0x8] sm:$0xf]
    %v299 = vld [vmem:[%s5 + $0xc] sm:$0xf]
    %v300 = vld [vmem:[%s6] sm:$0x1]
    %v302 = vlaneseq
    %v303 = vshrl.u32 %v302, 7
    %v304 = vsub.s32 0, %v303
    %v305 = vrot.slane %v300, %v304
    %v311 = vunpack.c.l.b16 %v296
    %v312 = vunpack.c.l.b16 %v297
    %v313 = vunpack.c.l.b16 %v298
    %v314 = vunpack.c.l.b16 %v299
    %v315 = vpack.c.b16 %v312, %v311
    %v316 = vpack.c.b16 %v314, %v313
    %v320 = vsel %vm91, %v295, 0
    %322 = vmatprep.subr.bf16.mxu0 0
    %323 = vmatpush1.bf16.msra.mxu0 %v315
    %324 = vmatprep.subr.bf16.mxu0 0
    %325 = vmatpush1.bf16.msra.mxu0 %v316
    %326 = vmatprep.subr.bf16.mxu0 0
    %327 = vmatpush1.bf16.msra.mxu0 0
    %328 = vmatprep.subr.bf16.mxu0 0
    %329 = vmatpush1.bf16.msra.mxu0 0
    %330 = vmatprep.subr.bf16.mxu0 0
    %331 = vmatpush1.bf16.msra.mxu0 0
    %332 = vmatprep.subr.bf16.mxu0 0
    %333 = vmatpush1.bf16.msra.mxu0 0
    %334 = vmatprep.subr.bf16.mxu0 0
    %335 = vmatpush1.bf16.msra.mxu0 0
    %336 = vmatprep.subr.bf16.mxu0 0
    %337 = vmatpush1.bf16.msra.mxu0 0
    %338 = vmatprep.subr.bf16.mxu0 0
    %339 = vmatpush1.bf16.msra.mxu0 0
    %340 = vmatprep.subr.bf16.mxu0 0
    %341 = vmatpush1.bf16.msra.mxu0 0
    %342 = vmatprep.subr.bf16.mxu0 0
    %343 = vmatpush1.bf16.msra.mxu0 0
    %344 = vmatprep.subr.bf16.mxu0 0
    %345 = vmatpush1.bf16.msra.mxu0 0
    %346 = vmatprep.subr.bf16.mxu0 0
    %347 = vmatpush1.bf16.msra.mxu0 0
    %348 = vmatprep.subr.bf16.mxu0 0
    %349 = vmatpush1.bf16.msra.mxu0 0
    %350 = vmatprep.subr.bf16.mxu0 0
    %351 = vmatpush1.bf16.msra.mxu0 0
    %352 = vmatprep.subr.bf16.mxu0 0
    %353 = vmatpush1.bf16.msra.mxu0 0
    %354 = vmatprep.mubr.bf16.mxu0 0
    %355 = vmatmul.mubr.bf16.gmra.mrb[0].mxu0 %v320
    %v356 = vpop.f32.mrb[0].mxu0
    %v357 = vadd.f32 %v305, %v356
    %v358 = vpop.f32.mrb[0].mxu0
    %v359 = vpop.f32.mrb[0].mxu0
    %v360 = vpop.f32.mrb[0].mxu0
    %361 = vdwg.mxu0
    %362 = vst [vmem:[#allocation8] sm:$0x3] %v357
    // Predicated region
    $region42: #{cnn_forward_packed.1} parent=1 // pred_check
      _
    $region43: #{cnn_forward_packed.1} parent=1 // pred_check_branch
      %364 = sbr.rel (0) target = $region45
    $region44: #{cnn_forward_packed.1} parent=1 // pred_region
      %s366 = ssub.s32 32, 32
      %367 = vsyncadd [#allocation4], %s366
      %s369 = sshll.u32 [#allocation8], 4
      %s370 = int_to_ptr.vmem [resolvable:$true] %s369
      %372 = dma.vmem_to_hbm [thread:$0]  %s370, 32, %s7, [#allocation4]
    $region45: #{cnn_forward_packed.1} parent=1 // pred_fallthru
      _
    // Predicated region
    $region46: #{cnn_forward_packed.1} parent=1 // pred_check
      _
    $region47: #{cnn_forward_packed.1} parent=1 // pred_check_branch
      %374 = sbr.rel (0) target = $region49
    $region48: #{cnn_forward_packed.1} parent=1 // pred_region
      %375 = dma.done [#allocation4], 32
    $region49: #{cnn_forward_packed.1} parent=1 // pred_fallthru
      _
    %376 = vsyncpa [#allocation3], 1
    %377 = vsyncpa [#allocation6], 1
    %378 = vsyncpa [#allocation4], 1

</llo_original>
